<compile_context>
chip_gen: v5e
topology: v5e:2x2
jax: 0.10.0
libtpu: 0.0.40
codegen_flags: <defaults>
</compile_context>

<pallas_src>
import functools

import jax
import jax.numpy as jnp
from jax import lax
from jax.experimental import pallas as pl
from jax.experimental.pallas import tpu as pltpu


def _round_up(n, m):
    return ((n + m - 1) // m) * m


def _cdiv(a, b):
    return -(-a // b)


def _vmem_budget_bytes():
    """~80% of this generation's VMEM (v5e/v6e: 128 MiB, v7x: 64 MiB per TC)."""
    cap = 128 << 20
    try:
        info = pltpu.get_tpu_info()
        cap = int(getattr(info, "vmem_capacity_bytes", cap)) or cap
    except Exception:
        pass
    return int(cap * 0.80)


def biaffine_forward(x, y, U, *, bias_x=True, bias_y=True,
                     native_layout=False, out_dtype=jnp.float32):
    """x: (B, Lx, in_size), y: (B, Ly, in_size), U: (I, O, J).

    Returns (B, Lx, Ly, O) (PyTorch layout) or (B, O, Lx, Ly) if native_layout.
    """
    B, Lx, in_size = x.shape
    By, Ly, in_size_y = y.shape
    assert By == B and in_size_y == in_size
    I = in_size + int(bias_x)
    J = in_size + int(bias_y)
    O = U.shape[1]
    assert U.shape == (I, O, J)

    # Contraction dims padded to 128 (lane-dense MXU K); the bias column is
    # folded into the pad region (matching U rows/cols are zero -> exact).
    Ipad = _round_up(I, 128)
    Jpad = _round_up(J, 128)
    # Lane-dense Ly so every output store is an unmasked full-lane vst.
    Lyp = _round_up(Ly, 128)

    # O chunking: bounds the live (tlx, o_chunk*Jpad) f32 intermediate.
    o_chunk = min(8, O)
    O_pad = _round_up(O, o_chunk)
    n_chunks = O_pad // o_chunk
    Cw = o_chunk * Jpad                       # lane width of one U chunk

    out_bytes = jnp.dtype(out_dtype).itemsize
    budget = _vmem_budget_bytes()
    u_bytes = n_chunks * Ipad * Cw * 2        # resident, single-buffered

    def _vmem_est(tlx):
        return (u_bytes
                + 2 * tlx * Ipad * 2                  # x tile, double-buffered
                + 2 * Jpad * Lyp * 2                  # yT tile, double-buffered
                + 2 * O_pad * tlx * Lyp * out_bytes   # out tile, double-buffered
                + 2 * tlx * Cw * 6                    # t (f32 + bf16), 2 unrolled chunks
                + o_chunk * tlx * Lyp * 4)            # 2nd-matmul results pre-store

    # cdiv-style Lx tiling: large tiles (<= 512), minimal padding; shrink while
    # the VMEM estimate exceeds this generation's budget.
    cap = 512
    while True:
        n_lx = max(1, _cdiv(Lx, cap))
        tlx = _round_up(_cdiv(Lx, n_lx), 8)
        if _vmem_est(tlx) <= budget or cap <= 8:
            break
        cap = max(8, cap // 2)
    Lxp = tlx * n_lx
    # TODO(synk): if the estimate still exceeds the budget at tlx=8 (huge O*Ly
    # on v7x), additionally tile Ly and/or stream U O-chunks via a grid axis.

    # ---- XLA glue: pad, fold bias, pre-transpose y, pack U ----
    # (U packing is weight-only work; in a real model hoist it to param init.)
    x_p = jnp.pad(x, ((0, 0), (0, Lxp - Lx), (0, Ipad - in_size)))
    if bias_x:
        x_p = x_p.at[:, :Lx, in_size].set(1.0)
    y_p = jnp.pad(y, ((0, 0), (0, Lyp - Ly), (0, Jpad - in_size)))
    if bias_y:
        y_p = y_p.at[:, :Ly, in_size].set(1.0)

    U_p = jnp.pad(U, ((0, Ipad - I), (0, O_pad - O), (0, Jpad - J)))
    # (Ipad, O_pad, Jpad) -> (n_chunks, Ipad, o_chunk*Jpad): lane-dense per-chunk RHS.
    U3 = (U_p.reshape(Ipad, n_chunks, o_chunk, Jpad)
              .transpose(1, 0, 2, 3)
              .reshape(n_chunks, Ipad, Cw)
              .astype(jnp.bfloat16))

    x_bf = x_p.astype(jnp.bfloat16)
    yT_bf = jnp.transpose(y_p, (0, 2, 1)).astype(jnp.bfloat16)    # (B, Jpad, Lyp)

    def kernel(x_ref, u_ref, yt_ref, o_ref):
        # x_ref : (tlx, Ipad)            bf16
        # u_ref : (n_chunks, Ipad, Cw)   bf16  (VMEM-resident, single buffer)
        # yt_ref: (Jpad, Lyp)            bf16
        # o_ref : (O_pad, tlx, Lyp)      out_dtype
        def process_chunk(c):
            # Fused first contraction for this O-chunk (lane-dense N = Cw).
            t = jnp.dot(x_ref[...], u_ref[c],
                        preferred_element_type=jnp.float32)       # (tlx, Cw)
            # bf16 for the second MXU pass (f32 accumulation below).
            # TODO(synk): keep t in f32 here if downstream needs tighter scores.
            t = t.astype(jnp.bfloat16)
            for k in range(o_chunk):      # small static loop (<= 8 heads)
                o_ref[c * o_chunk + k] = jnp.dot(
                    t[:, k * Jpad:(k + 1) * Jpad], yt_ref[...],
                    preferred_element_type=jnp.float32).astype(o_ref.dtype)

        if n_chunks == 1:
            process_chunk(0)
        else:
            def body(c, carry):
                process_chunk(c)
                return carry
            # Bounded scheduling window; unroll=2 lets chunk k+1's first matmul
            # overlap chunk k's second matmuls without unbounded live ranges.
            lax.fori_loop(0, n_chunks, body, 0, unroll=2)

    out_full = pl.pallas_call(
        kernel,
        out_shape=jax.ShapeDtypeStruct((B, O_pad, Lxp, Lyp), out_dtype),
        grid_spec=pltpu.PrefetchScalarGridSpec(
            num_scalar_prefetch=0,
            grid=(B, n_lx),
            in_specs=[
                pl.BlockSpec((pl.Squeezed(), tlx, Ipad), lambda b, lt: (b, lt, 0)),
                # Constant block: resident, single-buffered (no wasted 2nd copy).
                pl.BlockSpec((n_chunks, Ipad, Cw), lambda b, lt: (0, 0, 0),
                             pipeline_mode=pl.Buffered(1)),
                pl.BlockSpec((pl.Squeezed(), Jpad, Lyp), lambda b, lt: (b, 0, 0)),
            ],
            out_specs=pl.BlockSpec((pl.Squeezed(), O_pad, tlx, Lyp),
                                   lambda b, lt: (b, 0, lt, 0)),
        ),
        compiler_params=pltpu.CompilerParams(
            # TODO(synk): on v7x, consider CORE_PARALLEL / pl.core_map if
            # profiling shows only one TensorCore is active.
            dimension_semantics=("parallel", "parallel"),
            vmem_limit_bytes=budget),
    )(x_bf, U3, yT_bf)

    out = out_full[:, :O, :Lx, :Ly]
    if native_layout:
        return out                                    # (B, O, Lx, Ly), lane-dense
    # PyTorch layout; pure layout work (pass native_layout=True to skip it).
    return jnp.transpose(out, (0, 2, 3, 1))           # (B, Lx, Ly, O)


if __name__ == "__main__":
    # Small shapes consistent with the module's forward.
    B, Lx, Ly, in_size, out_size = 2, 8, 8, 32, 4
    bias_x, bias_y = True, True

    key = jax.random.PRNGKey(0)
    kx, ky, ku = jax.random.split(key, 3)
    x = jax.random.normal(kx, (B, Lx, in_size), dtype=jnp.float32)
    y = jax.random.normal(ky, (B, Ly, in_size), dtype=jnp.float32)
    # Deterministic stand-in for torch.randn parameter init.
    U = jax.random.normal(
        ku, (in_size + int(bias_x), out_size, in_size + int(bias_y)),
        dtype=jnp.float32)

    fwd = jax.jit(functools.partial(biaffine_forward, bias_x=bias_x, bias_y=bias_y))
    out = jax.block_until_ready(fwd(x, y, U))

    # Pure-JAX f32 reference (same math as the torch.einsum).
    x_b = jnp.concatenate([x, jnp.ones_like(x[..., :1])], axis=-1)
    y_b = jnp.concatenate([y, jnp.ones_like(y[..., :1])], axis=-1)
    ref = jnp.einsum('bxi,ioj,byj->bxyo', x_b, U, y_b)

    assert out.shape == (B, Lx, Ly, out_size), out.shape
    # Tolerance relaxed vs the f32 reference because kernel matmuls run in bf16
    # (f32 accumulation); output magnitude here is ~sqrt(I*J) ~ 33.
    assert jnp.allclose(out, ref, atol=1.0, rtol=2e-2), "mismatch vs reference"
    print("KERNEL_OK")
</pallas_src>

<mosaic_0001>
module attributes {stable_mosaic.version = 11 : i64} {
  func.func @kernel(%arg0: i32, %arg1: i32, %arg2: memref<1x8x128xbf16, #tpu.memory_space<vmem>>, %arg3: memref<1x128x512xbf16, #tpu.memory_space<vmem>>, %arg4: memref<1x128x128xbf16, #tpu.memory_space<vmem>>, %arg5: memref<1x4x8x128xf32, #tpu.memory_space<vmem>>) attributes {dimension_semantics = [#tpu.dimension_semantics<parallel>, #tpu.dimension_semantics<parallel>], iteration_bounds = array<i64: 2, 1>, scalar_prefetch = 0 : i64, scratch_operands = 0 : i64, tpu.core_type = #tpu.core_type<tc>, window_params = [{transform_indices = @transform_0, window_bounds = array<i64: 1, 8, 128>}, {pipeline_mode = #tpu.pipeline_mode<synchronous>, transform_indices = @transform_1, window_bounds = array<i64: 1, 128, 512>}, {transform_indices = @transform_2, window_bounds = array<i64: 1, 128, 128>}, {transform_indices = @transform_3, window_bounds = array<i64: 1, 4, 8, 128>}]} {
    %c0 = arith.constant 0 : index
    %c0_0 = arith.constant 0 : index
    %c0_1 = arith.constant 0 : index
    %0 = vector.load %arg2[%c0, %c0_0, %c0_1] : memref<1x8x128xbf16, #tpu.memory_space<vmem>>, vector<1x8x128xbf16>
    %1 = vector.shape_cast %0 : vector<1x8x128xbf16> to vector<8x128xbf16>
    %c0_2 = arith.constant 0 : index
    %c0_3 = arith.constant 0 : index
    %c0_4 = arith.constant 0 : index
    %2 = vector.load %arg3[%c0_2, %c0_3, %c0_4] : memref<1x128x512xbf16, #tpu.memory_space<vmem>>, vector<1x128x512xbf16>
    %3 = vector.shape_cast %2 : vector<1x128x512xbf16> to vector<128x512xbf16>
    %cst = arith.constant dense<0.000000e+00> : vector<8x512xf32>
    %4 = tpu.matmul %1, %3, %cst {dimension_numbers = #tpu.dot_dimension_numbers<[1], [0], [0], [1], [0, 0, 1, 1], [], []>} : vector<8x128xbf16>, vector<128x512xbf16>, vector<8x512xf32> -> vector<8x512xf32>
    %5 = arith.truncf %4 : vector<8x512xf32> to vector<8x512xbf16>
    %6 = vector.extract_strided_slice %5 {offsets = [0, 0], sizes = [8, 128], strides = [1, 1]} : vector<8x512xbf16> to vector<8x128xbf16>
    %c0_5 = arith.constant 0 : index
    %c0_6 = arith.constant 0 : index
    %c0_7 = arith.constant 0 : index
    %7 = vector.load %arg4[%c0_5, %c0_6, %c0_7] : memref<1x128x128xbf16, #tpu.memory_space<vmem>>, vector<1x128x128xbf16>
    %8 = vector.shape_cast %7 : vector<1x128x128xbf16> to vector<128x128xbf16>
    %cst_8 = arith.constant dense<0.000000e+00> : vector<8x128xf32>
    %9 = tpu.matmul %6, %8, %cst_8 {dimension_numbers = #tpu.dot_dimension_numbers<[1], [0], [0], [1], [0, 0, 1, 1], [], []>} : vector<8x128xbf16>, vector<128x128xbf16>, vector<8x128xf32> -> vector<8x128xf32>
    %c0_9 = arith.constant 0 : index
    %c0_10 = arith.constant 0 : index
    %c0_11 = arith.constant 0 : index
    %c0_12 = arith.constant 0 : index
    %10 = vector.load %arg5[%c0_9, %c0_10, %c0_11, %c0_12] : memref<1x4x8x128xf32, #tpu.memory_space<vmem>>, vector<1x1x8x128xf32>
    %11 = vector.shape_cast %10 : vector<1x1x8x128xf32> to vector<8x128xf32>
    %12 = vector.shape_cast %9 : vector<8x128xf32> to vector<1x1x8x128xf32>
    tpu.vector_store %arg5[%c0_9, %c0_10, %c0_11, %c0_12], %12 {strides = array<i32>} : memref<1x4x8x128xf32, #tpu.memory_space<vmem>>, vector<1x1x8x128xf32>,
    %13 = vector.extract_strided_slice %5 {offsets = [0, 128], sizes = [8, 128], strides = [1, 1]} : vector<8x512xbf16> to vector<8x128xbf16>
    %c0_13 = arith.constant 0 : index
    %c0_14 = arith.constant 0 : index
    %c0_15 = arith.constant 0 : index
    %14 = vector.load %arg4[%c0_13, %c0_14, %c0_15] : memref<1x128x128xbf16, #tpu.memory_space<vmem>>, vector<1x128x128xbf16>
    %15 = vector.shape_cast %14 : vector<1x128x128xbf16> to vector<128x128xbf16>
    %cst_16 = arith.constant dense<0.000000e+00> : vector<8x128xf32>
    %16 = tpu.matmul %13, %15, %cst_16 {dimension_numbers = #tpu.dot_dimension_numbers<[1], [0], [0], [1], [0, 0, 1, 1], [], []>} : vector<8x128xbf16>, vector<128x128xbf16>, vector<8x128xf32> -> vector<8x128xf32>
    %c0_17 = arith.constant 0 : index
    %c1 = arith.constant 1 : index
    %c0_18 = arith.constant 0 : index
    %c0_19 = arith.constant 0 : index
    %17 = vector.load %arg5[%c0_17, %c1, %c0_18, %c0_19] : memref<1x4x8x128xf32, #tpu.memory_space<vmem>>, vector<1x1x8x128xf32>
    %18 = vector.shape_cast %17 : vector<1x1x8x128xf32> to vector<8x128xf32>
    %19 = vector.shape_cast %16 : vector<8x128xf32> to vector<1x1x8x128xf32>
    tpu.vector_store %arg5[%c0_17, %c1, %c0_18, %c0_19], %19 {strides = array<i32>} : memref<1x4x8x128xf32, #tpu.memory_space<vmem>>, vector<1x1x8x128xf32>,
    %20 = vector.extract_strided_slice %5 {offsets = [0, 256], sizes = [8, 128], strides = [1, 1]} : vector<8x512xbf16> to vector<8x128xbf16>
    %c0_20 = arith.constant 0 : index
    %c0_21 = arith.constant 0 : index
    %c0_22 = arith.constant 0 : index
    %21 = vector.load %arg4[%c0_20, %c0_21, %c0_22] : memref<1x128x128xbf16, #tpu.memory_space<vmem>>, vector<1x128x128xbf16>
    %22 = vector.shape_cast %21 : vector<1x128x128xbf16> to vector<128x128xbf16>
    %cst_23 = arith.constant dense<0.000000e+00> : vector<8x128xf32>
    %23 = tpu.matmul %20, %22, %cst_23 {dimension_numbers = #tpu.dot_dimension_numbers<[1], [0], [0], [1], [0, 0, 1, 1], [], []>} : vector<8x128xbf16>, vector<128x128xbf16>, vector<8x128xf32> -> vector<8x128xf32>
    %c0_24 = arith.constant 0 : index
    %c2 = arith.constant 2 : index
    %c0_25 = arith.constant 0 : index
    %c0_26 = arith.constant 0 : index
    %24 = vector.load %arg5[%c0_24, %c2, %c0_25, %c0_26] : memref<1x4x8x128xf32, #tpu.memory_space<vmem>>, vector<1x1x8x128xf32>
    %25 = vector.shape_cast %24 : vector<1x1x8x128xf32> to vector<8x128xf32>
    %26 = vector.shape_cast %23 : vector<8x128xf32> to vector<1x1x8x128xf32>
    tpu.vector_store %arg5[%c0_24, %c2, %c0_25, %c0_26], %26 {strides = array<i32>} : memref<1x4x8x128xf32, #tpu.memory_space<vmem>>, vector<1x1x8x128xf32>,
    %27 = vector.extract_strided_slice %5 {offsets = [0, 384], sizes = [8, 128], strides = [1, 1]} : vector<8x512xbf16> to vector<8x128xbf16>
    %c0_27 = arith.constant 0 : index
    %c0_28 = arith.constant 0 : index
    %c0_29 = arith.constant 0 : index
    %28 = vector.load %arg4[%c0_27, %c0_28, %c0_29] : memref<1x128x128xbf16, #tpu.memory_space<vmem>>, vector<1x128x128xbf16>
    %29 = vector.shape_cast %28 : vector<1x128x128xbf16> to vector<128x128xbf16>
    %cst_30 = arith.constant dense<0.000000e+00> : vector<8x128xf32>
    %30 = tpu.matmul %27, %29, %cst_30 {dimension_numbers = #tpu.dot_dimension_numbers<[1], [0], [0], [1], [0, 0, 1, 1], [], []>} : vector<8x128xbf16>, vector<128x128xbf16>, vector<8x128xf32> -> vector<8x128xf32>
    %c0_31 = arith.constant 0 : index
    %c3 = arith.constant 3 : index
    %c0_32 = arith.constant 0 : index
    %c0_33 = arith.constant 0 : index
    %31 = vector.load %arg5[%c0_31, %c3, %c0_32, %c0_33] : memref<1x4x8x128xf32, #tpu.memory_space<vmem>>, vector<1x1x8x128xf32>
    %32 = vector.shape_cast %31 : vector<1x1x8x128xf32> to vector<8x128xf32>
    %33 = vector.shape_cast %30 : vector<8x128xf32> to vector<1x1x8x128xf32>
    tpu.vector_store %arg5[%c0_31, %c3, %c0_32, %c0_33], %33 {strides = array<i32>} : memref<1x4x8x128xf32, #tpu.memory_space<vmem>>, vector<1x1x8x128xf32>,
    return
  }
  func.func @transform_0(%arg0: i32, %arg1: i32) -> (i32, i32, i32) {
    %c0_i32 = arith.constant 0 : i32
    %c0_i32_0 = arith.constant 0 : i32
    return %arg0, %arg1, %c0_i32 : i32, i32, i32
  }
  func.func @transform_1(%arg0: i32, %arg1: i32) -> (i32, i32, i32) {
    %c0_i32 = arith.constant 0 : i32
    %c0_i32_0 = arith.constant 0 : i32
    %c0_i32_1 = arith.constant 0 : i32
    %c0_i32_2 = arith.constant 0 : i32
    return %c0_i32, %c0_i32_0, %c0_i32_1 : i32, i32, i32
  }
  func.func @transform_2(%arg0: i32, %arg1: i32) -> (i32, i32, i32) {
    %c0_i32 = arith.constant 0 : i32
    %c0_i32_0 = arith.constant 0 : i32
    %c0_i32_1 = arith.constant 0 : i32
    return %arg0, %c0_i32, %c0_i32_0 : i32, i32, i32
  }
  func.func @transform_3(%arg0: i32, %arg1: i32) -> (i32, i32, i32, i32) {
    %c0_i32 = arith.constant 0 : i32
    %c0_i32_0 = arith.constant 0 : i32
    %c0_i32_1 = arith.constant 0 : i32
    return %arg0, %c0_i32, %arg1, %c0_i32_0 : i32, i32, i32, i32
  }
}

</mosaic_0001>

<llo_original>
// kernel: biaffine_forward.1
$region0: #{biaffine_forward.1}
  #allocation0 [shape = 'u32[]', space=smem, size = 0x4, offset = 0x4, fixed_abs, tag = 'smem constant byte address 0x4 - core index']
  #allocation1 [shape = 'u32[72,128]{1,0:T(1,128)}', space=vmem, size = 0x9000, scoped, tag = 'internal scratch']
  %s0 = inlined_call_operand.vmem [shape: bf16[2,8,128], index: 0, kind: input, shape index: {}]
  %s1 = inlined_call_operand.vmem [shape: bf16[1,128,512], index: 1, kind: input, shape index: {}]
  %s2 = inlined_call_operand.vmem [shape: bf16[2,128,128], index: 2, kind: input, shape index: {}]
  %s3 = inlined_call_operand.vmem [shape: f32[2,4,8,128], index: 3, kind: output, shape index: {}]
  %s4 = sld [smem:[#allocation0]]
  $region45: #{biaffine_forward.1} parent=0
    _
  %s6 = ssub.s32 1, %s4
  %s7 = scalar_select 0, %s6, %s4
  loop: start=0, step=1, limit=4
  $region2: #{biaffine_forward.1} parent=0 // loop_pre_header
    _
  $region3: #{biaffine_forward.1} parent=0 // loop_header
    %s9 = sphi 0, %s13
    %p10 = scmp.ge.s32.totalorder %s9, 4
    %s16 = sphi 0, %s28
    %s17 = sphi 0, %s24
    %s18 = sphi 0, %s16
    %s19 = sphi 0, %s17
    %s20 = sphi 0, %s18
    %s21 = sphi 0, %s19
    %s33 = sphi 0, %s35
    %s36 = sphi 0, %s33
    %s37 = sphi 0, %s36
    %s53 = sphi 0, %s37
    %s57 = sphi 0, %s57
    %s59 = sphi 0, %s57
    %s60 = sphi 0, %s59
    %s74 = sphi 0, %s60
    %s80 = sphi 0, %s82
    %s83 = sphi 0, %s80
    %s84 = sphi 0, %s83
    %s100 = sphi 0, %s84
    %s108 = sphi 0, %s110
    %s111 = sphi 0, %s108
    %s112 = sphi 0, %s111
    %s128 = sphi 0, %s112
  $region4: #{biaffine_forward.1} parent=0 // loop_header_branch
    %12 = sbr.rel (%p10) target = $region8
  $region5: #{biaffine_forward.1} parent=0 // loop_body
    %s14 = ssub.s32 %s9, 1
    %s15 = ssub.s32 %s9, 2
    %s22 = sadd.s32 1, %s17
    %p23 = scmp.ge.s32.totalorder %s22, 1
    %s24 = scalar_select %p23, 0, %s22
    %s25 = sadd.s32 1, %s16
    %s26 = scalar_select %p23, %s25, %s16
    %p27 = scmp.ge.s32.totalorder %s26, 2
    %s28 = scalar_select %p27, 0, %s26
    %s29 = ssub.s32 %s16, %s28
    %s30 = ssub.s32 %s17, %s24
    %s31 = sor.u32 %s29, %s30
    %p32 = scmp.eq.s32.totalorder %s31, 0
    %s34 = sadd.s32 %s33, 1
    %s35 = scalar_select %p32, %s33, %s34
    %p38 = pneg %p32
    %p39 = scmp.eq.s32.totalorder %s9, 1
    %p40 = por %p38, %p39
    %p41 = scmp.ne.s32.totalorder %s33, %s36
    %p42 = scmp.eq.s32.totalorder %s9, 0
    %p43 = por %p41, %p42
    %p44 = scmp.ne.s32.totalorder %s33, %s36
    %p45 = scmp.eq.s32.totalorder %s14, 1
    %p46 = por %p44, %p45
    %p47 = scmp.ne.s32.totalorder %s36, %s37
    %p48 = scmp.eq.s32.totalorder %s14, 0
    %p49 = por %p47, %p48
    %p50 = scmp.ne.s32.totalorder %s36, %s37
    %p51 = scmp.eq.s32.totalorder %s15, 1
    %p52 = por %p50, %p51
    %p54 = scmp.ne.s32.totalorder %s37, %s53
    %p55 = scmp.eq.s32.totalorder %s15, 0
    %p56 = por %p54, %p55
    %s58 = sadd.s32 %s57, 1
    %p61 = scmp.eq.s32.totalorder %s9, 1
    %p62 = scmp.ne.s32.totalorder %s57, %s59
    %p63 = scmp.eq.s32.totalorder %s9, 0
    %p64 = por %p62, %p63
    %p65 = scmp.ne.s32.totalorder %s57, %s59
    %p66 = scmp.eq.s32.totalorder %s14, 1
    %p67 = por %p65, %p66
    %p68 = scmp.ne.s32.totalorder %s59, %s60
    %p69 = scmp.eq.s32.totalorder %s14, 0
    %p70 = por %p68, %p69
    %p71 = scmp.ne.s32.totalorder %s59, %s60
    %p72 = scmp.eq.s32.totalorder %s15, 1
    %p73 = por %p71, %p72
    %p75 = scmp.ne.s32.totalorder %s60, %s74
    %p76 = scmp.eq.s32.totalorder %s15, 0
    %p77 = por %p75, %p76
    %s78 = ssub.s32 %s16, %s28
    %p79 = scmp.eq.s32.totalorder %s78, 0
    %s81 = sadd.s32 %s80, 1
    %s82 = scalar_select %p79, %s80, %s81
    %p85 = pneg %p79
    %p86 = scmp.eq.s32.totalorder %s9, 1
    %p87 = por %p85, %p86
    %p88 = scmp.ne.s32.totalorder %s80, %s83
    %p89 = scmp.eq.s32.totalorder %s9, 0
    %p90 = por %p88, %p89
    %p91 = scmp.ne.s32.totalorder %s80, %s83
    %p92 = scmp.eq.s32.totalorder %s14, 1
    %p93 = por %p91, %p92
    %p94 = scmp.ne.s32.totalorder %s83, %s84
    %p95 = scmp.eq.s32.totalorder %s14, 0
    %p96 = por %p94, %p95
    %p97 = scmp.ne.s32.totalorder %s83, %s84
    %p98 = scmp.eq.s32.totalorder %s15, 1
    %p99 = por %p97, %p98
    %p101 = scmp.ne.s32.totalorder %s84, %s100
    %p102 = scmp.eq.s32.totalorder %s15, 0
    %p103 = por %p101, %p102
    %s104 = ssub.s32 %s16, %s28
    %s105 = ssub.s32 %s17, %s24
    %s106 = sor.u32 %s104, %s105
    %p107 = scmp.eq.s32.totalorder %s106, 0
    %s109 = sadd.s32 %s108, 1
    %s110 = scalar_select %p107, %s108, %s109
    %p113 = pneg %p107
    %p114 = scmp.eq.s32.totalorder %s9, 1
    %p115 = por %p113, %p114
    %p116 = scmp.ne.s32.totalorder %s108, %s111
    %p117 = scmp.eq.s32.totalorder %s9, 0
    %p118 = por %p116, %p117
    %p119 = scmp.ne.s32.totalorder %s108, %s111
    %p120 = scmp.eq.s32.totalorder %s14, 1
    %p121 = por %p119, %p120
    %p122 = scmp.ne.s32.totalorder %s111, %s112
    %p123 = scmp.eq.s32.totalorder %s14, 0
    %p124 = por %p122, %p123
    %p125 = scmp.ne.s32.totalorder %s111, %s112
    %p126 = scmp.eq.s32.totalorder %s15, 1
    %p127 = por %p125, %p126
    %p129 = scmp.ne.s32.totalorder %s112, %s128
    %p130 = scmp.eq.s32.totalorder %s15, 0
    %p131 = por %p129, %p130
    %p132 = scmp.le.s32.totalorder 1, %s9
    %p133 = scmp.lt.s32.totalorder %s9, 3
    %p134 = pnand %p132, %p133
    %p135 = pneg %p134
    // Predicated region
    $region9: #{biaffine_forward.1} parent=5 // pred_check
      _
    $region10: #{biaffine_forward.1} parent=5 // pred_check_branch
      %137 = sbr.rel (%p134) target = $region12
    $region11: #{biaffine_forward.1} parent=5 // pred_region
      %s138 = ssub.s32 %s9, 1
      // Predicated region
      $region13: #{biaffine_forward.1} parent=11 // pred_check
        %p139 = pneg %p70
      $region14: #{biaffine_forward.1} parent=11 // pred_check_branch
        %141 = sbr.rel (%p139) target = $region16
      $region15: #{biaffine_forward.1} parent=11 // pred_region
        _
      $region16: #{biaffine_forward.1} parent=11 // pred_fallthru
        _
    $region12: #{biaffine_forward.1} parent=5 // pred_fallthru
      _
    %p142 = scmp.lt.s32.totalorder %s9, 2
    // Predicated region
    $region17: #{biaffine_forward.1} parent=5 // pred_check
      %p143 = pneg %p142
    $region18: #{biaffine_forward.1} parent=5 // pred_check_branch
      %145 = sbr.rel (%p143) target = $region20
    $region19: #{biaffine_forward.1} parent=5 // pred_region
      // Predicated region
      $region21: #{biaffine_forward.1} parent=19 // pred_check
        %p146 = pneg %p43
      $region22: #{biaffine_forward.1} parent=19 // pred_check_branch
        %148 = sbr.rel (%p146) target = $region24
      $region23: #{biaffine_forward.1} parent=19 // pred_region
        %p149 = scmp.lt.s32.totalorder %s16, 1
        %s150 = scalar_select %p149, %s16, 1
        %p151 = scmp.lt.s32.totalorder %s17, 0
        %s152 = scalar_select %p151, %s17, 0
        %s153 = sadd.s32 %s152, %s150
        %s154 = smul.addr %s153, 4
        %s155 = scalar_lea.vmem %s0, %s154
      $region24: #{biaffine_forward.1} parent=19 // pred_fallthru
        _
      // Predicated region
      $region25: #{biaffine_forward.1} parent=19 // pred_check
        %p156 = pneg %p90
      $region26: #{biaffine_forward.1} parent=19 // pred_check_branch
        %158 = sbr.rel (%p156) target = $region28
      $region27: #{biaffine_forward.1} parent=19 // pred_region
        %p159 = scmp.lt.s32.totalorder %s16, 1
        %s160 = scalar_select %p159, %s16, 1
        %s161 = smul.addr %s160, 16
        %s162 = smul.addr %s161, 4
        %s163 = scalar_lea.vmem %s2, %s162
      $region28: #{biaffine_forward.1} parent=19 // pred_fallthru
        _
    $region20: #{biaffine_forward.1} parent=5 // pred_fallthru
      _
    %p164 = scmp.le.s32.totalorder 1, %s9
    %p165 = scmp.lt.s32.totalorder %s9, 3
    %p166 = pnand %p164, %p165
    %p167 = pneg %p166
    // Predicated region
    $region29: #{biaffine_forward.1} parent=5 // pred_check
      _
    $region30: #{biaffine_forward.1} parent=5 // pred_check_branch
      %169 = sbr.rel (%p166) target = $region32
    $region31: #{biaffine_forward.1} parent=5 // pred_region
      %s170 = ssub.s32 %s9, 1
      %p171 = scmp.lt.s32.totalorder %s18, 1
      %s172 = scalar_select %p171, %s18, 1
      %p173 = scmp.lt.s32.totalorder %s19, 0
      %s174 = scalar_select %p173, %s19, 0
      %s175 = sadd.s32 %s174, %s172
      %s176 = smul.addr %s175, 4
      %s177 = scalar_lea.vmem %s0, %s176
      %p178 = pneg %p49
      %p179 = pneg %p46
      %p180 = pneg %p70
      %p181 = pneg %p67
      %p182 = scmp.lt.s32.totalorder %s18, 1
      %s183 = scalar_select %p182, %s18, 1
      %s184 = smul.addr %s183, 16
      %s185 = smul.addr %s184, 4
      %s186 = scalar_lea.vmem %s2, %s185
      %p187 = pneg %p96
      %p188 = pneg %p93
      %p189 = pneg %p124
      %p190 = pneg %p121
      %p191 = scmp.lt.s32.totalorder %s18, 1
      %s192 = scalar_select %p191, %s18, 1
      %p193 = scmp.lt.s32.totalorder %s19, 0
      %s194 = scalar_select %p193, %s19, 0
      %s195 = smul.addr %s192, 4
      %s196 = sadd.s32 %s194, %s195
      %s197 = smul.addr %s196, 8
      %s198 = scalar_lea.vmem %s3, %s197
      %p199 = scmp.lt.s32.totalorder %s18, 1
      %s200 = scalar_select %p199, %s18, 1
      %p201 = scmp.lt.s32.totalorder %s19, 0
      %s202 = scalar_select %p201, %s19, 0
      %s203 = sadd.s32 %s202, %s200
      %s204 = smul.addr %s203, 4
      %s205 = scalar_lea.vmem %s0, %s204
      %p206 = scmp.lt.s32.totalorder %s18, 1
      %s207 = scalar_select %p206, %s18, 1
      %s208 = smul.addr %s207, 16
      %s209 = smul.addr %s208, 4
      %s210 = scalar_lea.vmem %s2, %s209
      %p211 = scmp.lt.s32.totalorder %s18, 1
      %s212 = scalar_select %p211, %s18, 1
      %p213 = scmp.lt.s32.totalorder %s19, 0
      %s214 = scalar_select %p213, %s19, 0
      %s215 = smul.addr %s212, 4
      %s216 = sadd.s32 %s214, %s215
      %s217 = smul.addr %s216, 8
      %s218 = scalar_lea.vmem %s3, %s217
      %v219 = vld [vmem:[%s205] sm:$0xf]
      %v220 = vld [vmem:[%s1] sm:$0xff]
      %v221 = vld [vmem:[%s1 + $0x8] sm:$0xff]
      %v222 = vld [vmem:[%s1 + $0x10] sm:$0xff]
      %v223 = vld [vmem:[%s1 + $0x18] sm:$0xff]
      %v224 = vld [vmem:[%s1 + $0x20] sm:$0xff]
      %v225 = vld [vmem:[%s1 + $0x28] sm:$0xff]
      %v226 = vld [vmem:[%s1 + $0x30] sm:$0xff]
      %v227 = vld [vmem:[%s1 + $0x38] sm:$0xff]
      %v228 = vld [vmem:[%s1 + $0x40] sm:$0xff]
      %v229 = vld [vmem:[%s1 + $0x48] sm:$0xff]
      %v230 = vld [vmem:[%s1 + $0x50] sm:$0xff]
      %v231 = vld [vmem:[%s1 + $0x58] sm:$0xff]
      %v232 = vld [vmem:[%s1 + $0x60] sm:$0xff]
      %v233 = vld [vmem:[%s1 + $0x68] sm:$0xff]
      %v234 = vld [vmem:[%s1 + $0x70] sm:$0xff]
      %v235 = vld [vmem:[%s1 + $0x78] sm:$0xff]
      %v236 = vld [vmem:[%s1 + $0x80] sm:$0xff]
      %v237 = vld [vmem:[%s1 + $0x88] sm:$0xff]
      %v238 = vld [vmem:[%s1 + $0x90] sm:$0xff]
      %v239 = vld [vmem:[%s1 + $0x98] sm:$0xff]
      %v240 = vld [vmem:[%s1 + $0xa0] sm:$0xff]
      %v241 = vld [vmem:[%s1 + $0xa8] sm:$0xff]
      %v242 = vld [vmem:[%s1 + $0xb0] sm:$0xff]
      %v243 = vld [vmem:[%s1 + $0xb8] sm:$0xff]
      %v244 = vld [vmem:[%s1 + $0xc0] sm:$0xff]
      %v245 = vld [vmem:[%s1 + $0xc8] sm:$0xff]
      %v246 = vld [vmem:[%s1 + $0xd0] sm:$0xff]
      %v247 = vld [vmem:[%s1 + $0xd8] sm:$0xff]
      %v248 = vld [vmem:[%s1 + $0xe0] sm:$0xff]
      %v249 = vld [vmem:[%s1 + $0xe8] sm:$0xff]
      %v250 = vld [vmem:[%s1 + $0xf0] sm:$0xff]
      %v251 = vld [vmem:[%s1 + $0xf8] sm:$0xff]
      %v284 = vunpack.c.l.b16 %v220
      %v285 = vunpack.c.h.b16 %v220
      %v286 = vunpack.c.l.b16 %v221
      %v287 = vunpack.c.h.b16 %v221
      %v288 = vunpack.c.l.b16 %v222
      %v289 = vunpack.c.h.b16 %v222
      %v290 = vunpack.c.l.b16 %v223
      %v291 = vunpack.c.h.b16 %v223
      %v292 = vunpack.c.l.b16 %v224
      %v293 = vunpack.c.h.b16 %v224
      %v294 = vunpack.c.l.b16 %v225
      %v295 = vunpack.c.h.b16 %v225
      %v296 = vunpack.c.l.b16 %v226
      %v297 = vunpack.c.h.b16 %v226
      %v298 = vunpack.c.l.b16 %v227
      %v299 = vunpack.c.h.b16 %v227
      %v300 = vunpack.c.l.b16 %v228
      %v301 = vunpack.c.h.b16 %v228
      %v302 = vunpack.c.l.b16 %v229
      %v303 = vunpack.c.h.b16 %v229
      %v304 = vunpack.c.l.b16 %v230
      %v305 = vunpack.c.h.b16 %v230
      %v306 = vunpack.c.l.b16 %v231
      %v307 = vunpack.c.h.b16 %v231
      %v308 = vunpack.c.l.b16 %v232
      %v309 = vunpack.c.h.b16 %v232
      %v310 = vunpack.c.l.b16 %v233
      %v311 = vunpack.c.h.b16 %v233
      %v312 = vunpack.c.l.b16 %v234
      %v313 = vunpack.c.h.b16 %v234
      %v314 = vunpack.c.l.b16 %v235
      %v315 = vunpack.c.h.b16 %v235
      %v316 = vunpack.c.l.b16 %v236
      %v317 = vunpack.c.h.b16 %v236
      %v318 = vunpack.c.l.b16 %v237
      %v319 = vunpack.c.h.b16 %v237
      %v320 = vunpack.c.l.b16 %v238
      %v321 = vunpack.c.h.b16 %v238
      %v322 = vunpack.c.l.b16 %v239
      %v323 = vunpack.c.h.b16 %v239
      %v324 = vunpack.c.l.b16 %v240
      %v325 = vunpack.c.h.b16 %v240
      %v326 = vunpack.c.l.b16 %v241
      %v327 = vunpack.c.h.b16 %v241
      %v328 = vunpack.c.l.b16 %v242
      %v329 = vunpack.c.h.b16 %v242
      %v330 = vunpack.c.l.b16 %v243
      %v331 = vunpack.c.h.b16 %v243
      %v332 = vunpack.c.l.b16 %v244
      %v333 = vunpack.c.h.b16 %v244
      %v334 = vunpack.c.l.b16 %v245
      %v335 = vunpack.c.h.b16 %v245
      %v336 = vunpack.c.l.b16 %v246
      %v337 = vunpack.c.h.b16 %v246
      %v338 = vunpack.c.l.b16 %v247
      %v339 = vunpack.c.h.b16 %v247
      %v340 = vunpack.c.l.b16 %v248
      %v341 = vunpack.c.h.b16 %v248
      %v342 = vunpack.c.l.b16 %v249
      %v343 = vunpack.c.h.b16 %v249
      %v344 = vunpack.c.l.b16 %v250
      %v345 = vunpack.c.h.b16 %v250
      %v346 = vunpack.c.l.b16 %v251
      %v347 = vunpack.c.h.b16 %v251
      %v348 = vpack.c.b16 %v288, %v284
      %v349 = vpack.c.b16 %v289, %v285
      %v350 = vpack.c.b16 %v290, %v286
      %v351 = vpack.c.b16 %v291, %v287
      %v352 = vpack.c.b16 %v296, %v292
      %v353 = vpack.c.b16 %v297, %v293
      %v354 = vpack.c.b16 %v298, %v294
      %v355 = vpack.c.b16 %v299, %v295
      %v356 = vpack.c.b16 %v304, %v300
      %v357 = vpack.c.b16 %v305, %v301
      %v358 = vpack.c.b16 %v306, %v302
      %v359 = vpack.c.b16 %v307, %v303
      %v360 = vpack.c.b16 %v312, %v308
      %v361 = vpack.c.b16 %v313, %v309
      %v362 = vpack.c.b16 %v314, %v310
      %v363 = vpack.c.b16 %v315, %v311
      %v364 = vpack.c.b16 %v320, %v316
      %v365 = vpack.c.b16 %v321, %v317
      %v366 = vpack.c.b16 %v322, %v318
      %v367 = vpack.c.b16 %v323, %v319
      %v368 = vpack.c.b16 %v328, %v324
      %v369 = vpack.c.b16 %v329, %v325
      %v370 = vpack.c.b16 %v330, %v326
      %v371 = vpack.c.b16 %v331, %v327
      %v372 = vpack.c.b16 %v336, %v332
      %v373 = vpack.c.b16 %v337, %v333
      %v374 = vpack.c.b16 %v338, %v334
      %v375 = vpack.c.b16 %v339, %v335
      %v376 = vpack.c.b16 %v344, %v340
      %v377 = vpack.c.b16 %v345, %v341
      %v378 = vpack.c.b16 %v346, %v342
      %v379 = vpack.c.b16 %v347, %v343
      %412 = vmatpush.bf16.msra.mxu0 %v376
      %413 = vmatpush.bf16.msra.mxu0 %v372
      %414 = vmatpush.bf16.msra.mxu0 %v368
      %415 = vmatpush.bf16.msra.mxu0 %v364
      %416 = vmatpush.bf16.msra.mxu0 %v360
      %417 = vmatpush.bf16.msra.mxu0 %v356
      %418 = vmatpush.bf16.msra.mxu0 %v352
      %419 = vmatpush.bf16.msra.mxu0 %v348
      %420 = vmatmul.bf16.gmra.mxu0 %v219
      %v421 = vpop.f32.mrf.mxu0
      %v422 = vadd.f32 0.0, %v421
      %v423 = vpop.f32.mrf.mxu0
      %424 = vdwg.mxu0
      %425 = vmatpush.bf16.msra.mxu0 %v377
      %426 = vmatpush.bf16.msra.mxu0 %v373
      %427 = vmatpush.bf16.msra.mxu0 %v369
      %428 = vmatpush.bf16.msra.mxu0 %v365
      %429 = vmatpush.bf16.msra.mxu0 %v361
      %430 = vmatpush.bf16.msra.mxu0 %v357
      %431 = vmatpush.bf16.msra.mxu0 %v353
      %432 = vmatpush.bf16.msra.mxu0 %v349
      %433 = vmatmul.bf16.gmra.mxu0 %v219
      %v434 = vpop.f32.mrf.mxu0
      %v435 = vadd.f32 0.0, %v434
      %v436 = vpop.f32.mrf.mxu0
      %437 = vdwg.mxu0
      %438 = vmatpush.bf16.msra.mxu0 %v378
      %439 = vmatpush.bf16.msra.mxu0 %v374
      %440 = vmatpush.bf16.msra.mxu0 %v370
      %441 = vmatpush.bf16.msra.mxu0 %v366
      %442 = vmatpush.bf16.msra.mxu0 %v362
      %443 = vmatpush.bf16.msra.mxu0 %v358
      %444 = vmatpush.bf16.msra.mxu0 %v354
      %445 = vmatpush.bf16.msra.mxu0 %v350
      %446 = vmatmul.bf16.gmra.mxu0 %v219
      %v447 = vpop.f32.mrf.mxu0
      %v448 = vadd.f32 0.0, %v447
      %v449 = vpop.f32.mrf.mxu0
      %450 = vdwg.mxu0
      %451 = vmatpush.bf16.msra.mxu0 %v379
      %452 = vmatpush.bf16.msra.mxu0 %v375
      %453 = vmatpush.bf16.msra.mxu0 %v371
      %454 = vmatpush.bf16.msra.mxu0 %v367
      %455 = vmatpush.bf16.msra.mxu0 %v363
      %456 = vmatpush.bf16.msra.mxu0 %v359
      %457 = vmatpush.bf16.msra.mxu0 %v355
      %458 = vmatpush.bf16.msra.mxu0 %v351
      %459 = vmatmul.bf16.gmra.mxu0 %v219
      %v460 = vpop.f32.mrf.mxu0
      %v461 = vadd.f32 0.0, %v460
      %v462 = vpop.f32.mrf.mxu0
      %463 = vdwg.mxu0
      %v464 = vpack.c.bf16 %v435, %v422
      %v465 = vpack.c.bf16 %v461, %v448
      %v466 = vld [vmem:[%s210] sm:$0xf]
      %v467 = vld [vmem:[%s210 + $0x4] sm:$0xf]
      %v468 = vld [vmem:[%s210 + $0x8] sm:$0xf]
      %v469 = vld [vmem:[%s210 + $0xc] sm:$0xf]
      %v470 = vld [vmem:[%s210 + $0x10] sm:$0xf]
      %v471 = vld [vmem:[%s210 + $0x14] sm:$0xf]
      %v472 = vld [vmem:[%s210 + $0x18] sm:$0xf]
      %v473 = vld [vmem:[%s210 + $0x1c] sm:$0xf]
      %v474 = vld [vmem:[%s210 + $0x20] sm:$0xf]
      %v475 = vld [vmem:[%s210 + $0x24] sm:$0xf]
      %v476 = vld [vmem:[%s210 + $0x28] sm:$0xf]
      %v477 = vld [vmem:[%s210 + $0x2c] sm:$0xf]
      %v478 = vld [vmem:[%s210 + $0x30] sm:$0xf]
      %v479 = vld [vmem:[%s210 + $0x34] sm:$0xf]
      %v480 = vld [vmem:[%s210 + $0x38] sm:$0xf]
      %v481 = vld [vmem:[%s210 + $0x3c] sm:$0xf]
      %v498 = vunpack.c.l.b16 %v466
      %v499 = vunpack.c.l.b16 %v467
      %v500 = vunpack.c.l.b16 %v468
      %v501 = vunpack.c.l.b16 %v469
      %v502 = vunpack.c.l.b16 %v470
      %v503 = vunpack.c.l.b16 %v471
      %v504 = vunpack.c.l.b16 %v472
      %v505 = vunpack.c.l.b16 %v473
      %v506 = vunpack.c.l.b16 %v474
      %v507 = vunpack.c.l.b16 %v475
      %v508 = vunpack.c.l.b16 %v476
      %v509 = vunpack.c.l.b16 %v477
      %v510 = vunpack.c.l.b16 %v478
      %v511 = vunpack.c.l.b16 %v479
      %v512 = vunpack.c.l.b16 %v480
      %v513 = vunpack.c.l.b16 %v481
      %v514 = vpack.c.b16 %v499, %v498
      %v515 = vpack.c.b16 %v501, %v500
      %v516 = vpack.c.b16 %v503, %v502
      %v517 = vpack.c.b16 %v505, %v504
      %v518 = vpack.c.b16 %v507, %v506
      %v519 = vpack.c.b16 %v509, %v508
      %v520 = vpack.c.b16 %v511, %v510
      %v521 = vpack.c.b16 %v513, %v512
      %530 = vmatpush.bf16.msra.mxu0 %v521
      %531 = vmatpush.bf16.msra.mxu0 %v520
      %532 = vmatpush.bf16.msra.mxu0 %v519
      %533 = vmatpush.bf16.msra.mxu0 %v518
      %534 = vmatpush.bf16.msra.mxu0 %v517
      %535 = vmatpush.bf16.msra.mxu0 %v516
      %536 = vmatpush.bf16.msra.mxu0 %v515
      %537 = vmatpush.bf16.msra.mxu0 %v514
      %538 = vmatmul.bf16.gmra.mxu0 %v464
      %v539 = vpop.f32.mrf.mxu0
      %v540 = vadd.f32 0.0, %v539
      %v541 = vpop.f32.mrf.mxu0
      %542 = vdwg.mxu0
      %543 = vst [vmem:[%s218] sm:$0xff] %v540
      %v544 = vld [vmem:[%s210] sm:$0xf]
      %v545 = vld [vmem:[%s210 + $0x4] sm:$0xf]
      %v546 = vld [vmem:[%s210 + $0x8] sm:$0xf]
      %v547 = vld [vmem:[%s210 + $0xc] sm:$0xf]
      %v548 = vld [vmem:[%s210 + $0x10] sm:$0xf]
      %v549 = vld [vmem:[%s210 + $0x14] sm:$0xf]
      %v550 = vld [vmem:[%s210 + $0x18] sm:$0xf]
      %v551 = vld [vmem:[%s210 + $0x1c] sm:$0xf]
      %v552 = vld [vmem:[%s210 + $0x20] sm:$0xf]
      %v553 = vld [vmem:[%s210 + $0x24] sm:$0xf]
      %v554 = vld [vmem:[%s210 + $0x28] sm:$0xf]
      %v555 = vld [vmem:[%s210 + $0x2c] sm:$0xf]
      %v556 = vld [vmem:[%s210 + $0x30] sm:$0xf]
      %v557 = vld [vmem:[%s210 + $0x34] sm:$0xf]
      %v558 = vld [vmem:[%s210 + $0x38] sm:$0xf]
      %v559 = vld [vmem:[%s210 + $0x3c] sm:$0xf]
      %v561 = vunpack.c.h.b16 %v464
      %v562 = vpack.c.b16 %v561, %v561
      %v580 = vunpack.c.l.b16 %v544
      %v581 = vunpack.c.l.b16 %v545
      %v582 = vunpack.c.l.b16 %v546
      %v583 = vunpack.c.l.b16 %v547
      %v584 = vunpack.c.l.b16 %v548
      %v585 = vunpack.c.l.b16 %v549
      %v586 = vunpack.c.l.b16 %v550
      %v587 = vunpack.c.l.b16 %v551
      %v588 = vunpack.c.l.b16 %v552
      %v589 = vunpack.c.l.b16 %v553
      %v590 = vunpack.c.l.b16 %v554
      %v591 = vunpack.c.l.b16 %v555
      %v592 = vunpack.c.l.b16 %v556
      %v593 = vunpack.c.l.b16 %v557
      %v594 = vunpack.c.l.b16 %v558
      %v595 = vunpack.c.l.b16 %v559
      %v596 = vpack.c.b16 %v581, %v580
      %v597 = vpack.c.b16 %v583, %v582
      %v598 = vpack.c.b16 %v585, %v584
      %v599 = vpack.c.b16 %v587, %v586
      %v600 = vpack.c.b16 %v589, %v588
      %v601 = vpack.c.b16 %v591, %v590
      %v602 = vpack.c.b16 %v593, %v592
      %v603 = vpack.c.b16 %v595, %v594
      %612 = vmatpush.bf16.msra.mxu0 %v603
      %613 = vmatpush.bf16.msra.mxu0 %v602
      %614 = vmatpush.bf16.msra.mxu0 %v601
      %615 = vmatpush.bf16.msra.mxu0 %v600
      %616 = vmatpush.bf16.msra.mxu0 %v599
      %617 = vmatpush.bf16.msra.mxu0 %v598
      %618 = vmatpush.bf16.msra.mxu0 %v597
      %619 = vmatpush.bf16.msra.mxu0 %v596
      %620 = vmatmul.bf16.gmra.mxu0 %v562
      %v621 = vpop.f32.mrf.mxu0
      %v622 = vadd.f32 0.0, %v621
      %v623 = vpop.f32.mrf.mxu0
      %624 = vdwg.mxu0
      %s625 = scalar_lea.vmem %s218, 8
      %626 = vst [vmem:[%s625] sm:$0xff] %v622
      %v627 = vld [vmem:[%s210] sm:$0xf]
      %v628 = vld [vmem:[%s210 + $0x4] sm:$0xf]
      %v629 = vld [vmem:[%s210 + $0x8] sm:$0xf]
      %v630 = vld [vmem:[%s210 + $0xc] sm:$0xf]
      %v631 = vld [vmem:[%s210 + $0x10] sm:$0xf]
      %v632 = vld [vmem:[%s210 + $0x14] sm:$0xf]
      %v633 = vld [vmem:[%s210 + $0x18] sm:$0xf]
      %v634 = vld [vmem:[%s210 + $0x1c] sm:$0xf]
      %v635 = vld [vmem:[%s210 + $0x20] sm:$0xf]
      %v636 = vld [vmem:[%s210 + $0x24] sm:$0xf]
      %v637 = vld [vmem:[%s210 + $0x28] sm:$0xf]
      %v638 = vld [vmem:[%s210 + $0x2c] sm:$0xf]
      %v639 = vld [vmem:[%s210 + $0x30] sm:$0xf]
      %v640 = vld [vmem:[%s210 + $0x34] sm:$0xf]
      %v641 = vld [vmem:[%s210 + $0x38] sm:$0xf]
      %v642 = vld [vmem:[%s210 + $0x3c] sm:$0xf]
      %v659 = vunpack.c.l.b16 %v627
      %v660 = vunpack.c.l.b16 %v628
      %v661 = vunpack.c.l.b16 %v629
      %v662 = vunpack.c.l.b16 %v630
      %v663 = vunpack.c.l.b16 %v631
      %v664 = vunpack.c.l.b16 %v632
      %v665 = vunpack.c.l.b16 %v633
      %v666 = vunpack.c.l.b16 %v634
      %v667 = vunpack.c.l.b16 %v635
      %v668 = vunpack.c.l.b16 %v636
      %v669 = vunpack.c.l.b16 %v637
      %v670 = vunpack.c.l.b16 %v638
      %v671 = vunpack.c.l.b16 %v639
      %v672 = vunpack.c.l.b16 %v640
      %v673 = vunpack.c.l.b16 %v641
      %v674 = vunpack.c.l.b16 %v642
      %v675 = vpack.c.b16 %v660, %v659
      %v676 = vpack.c.b16 %v662, %v661
      %v677 = vpack.c.b16 %v664, %v663
      %v678 = vpack.c.b16 %v666, %v665
      %v679 = vpack.c.b16 %v668, %v667
      %v680 = vpack.c.b16 %v670, %v669
      %v681 = vpack.c.b16 %v672, %v671
      %v682 = vpack.c.b16 %v674, %v673
      %691 = vmatpush.bf16.msra.mxu0 %v682
      %692 = vmatpush.bf16.msra.mxu0 %v681
      %693 = vmatpush.bf16.msra.mxu0 %v680
      %694 = vmatpush.bf16.msra.mxu0 %v679
      %695 = vmatpush.bf16.msra.mxu0 %v678
      %696 = vmatpush.bf16.msra.mxu0 %v677
      %697 = vmatpush.bf16.msra.mxu0 %v676
      %698 = vmatpush.bf16.msra.mxu0 %v675
      %699 = vmatmul.bf16.gmra.mxu0 %v465
      %v700 = vpop.f32.mrf.mxu0
      %v701 = vadd.f32 0.0, %v700
      %v702 = vpop.f32.mrf.mxu0
      %703 = vdwg.mxu0
      %s704 = scalar_lea.vmem %s218, 16
      %705 = vst [vmem:[%s704] sm:$0xff] %v701
      %v706 = vld [vmem:[%s210] sm:$0xf]
      %v707 = vld [vmem:[%s210 + $0x4] sm:$0xf]
      %v708 = vld [vmem:[%s210 + $0x8] sm:$0xf]
      %v709 = vld [vmem:[%s210 + $0xc] sm:$0xf]
      %v710 = vld [vmem:[%s210 + $0x10] sm:$0xf]
      %v711 = vld [vmem:[%s210 + $0x14] sm:$0xf]
      %v712 = vld [vmem:[%s210 + $0x18] sm:$0xf]
      %v713 = vld [vmem:[%s210 + $0x1c] sm:$0xf]
      %v714 = vld [vmem:[%s210 + $0x20] sm:$0xf]
      %v715 = vld [vmem:[%s210 + $0x24] sm:$0xf]
      %v716 = vld [vmem:[%s210 + $0x28] sm:$0xf]
      %v717 = vld [vmem:[%s210 + $0x2c] sm:$0xf]
      %v718 = vld [vmem:[%s210 + $0x30] sm:$0xf]
      %v719 = vld [vmem:[%s210 + $0x34] sm:$0xf]
      %v720 = vld [vmem:[%s210 + $0x38] sm:$0xf]
      %v721 = vld [vmem:[%s210 + $0x3c] sm:$0xf]
      %v723 = vunpack.c.h.b16 %v465
      %v724 = vpack.c.b16 %v723, %v723
      %v742 = vunpack.c.l.b16 %v706
      %v743 = vunpack.c.l.b16 %v707
      %v744 = vunpack.c.l.b16 %v708
      %v745 = vunpack.c.l.b16 %v709
      %v746 = vunpack.c.l.b16 %v710
      %v747 = vunpack.c.l.b16 %v711
      %v748 = vunpack.c.l.b16 %v712
      %v749 = vunpack.c.l.b16 %v713
      %v750 = vunpack.c.l.b16 %v714
      %v751 = vunpack.c.l.b16 %v715
      %v752 = vunpack.c.l.b16 %v716
      %v753 = vunpack.c.l.b16 %v717
      %v754 = vunpack.c.l.b16 %v718
      %v755 = vunpack.c.l.b16 %v719
      %v756 = vunpack.c.l.b16 %v720
      %v757 = vunpack.c.l.b16 %v721
      %v758 = vpack.c.b16 %v743, %v742
      %v759 = vpack.c.b16 %v745, %v744
      %v760 = vpack.c.b16 %v747, %v746
      %v761 = vpack.c.b16 %v749, %v748
      %v762 = vpack.c.b16 %v751, %v750
      %v763 = vpack.c.b16 %v753, %v752
      %v764 = vpack.c.b16 %v755, %v754
      %v765 = vpack.c.b16 %v757, %v756
      %774 = vmatpush.bf16.msra.mxu0 %v765
      %775 = vmatpush.bf16.msra.mxu0 %v764
      %776 = vmatpush.bf16.msra.mxu0 %v763
      %777 = vmatpush.bf16.msra.mxu0 %v762
      %778 = vmatpush.bf16.msra.mxu0 %v761
      %779 = vmatpush.bf16.msra.mxu0 %v760
      %780 = vmatpush.bf16.msra.mxu0 %v759
      %781 = vmatpush.bf16.msra.mxu0 %v758
      %782 = vmatmul.bf16.gmra.mxu0 %v724
      %v783 = vpop.f32.mrf.mxu0
      %v784 = vadd.f32 0.0, %v783
      %v785 = vpop.f32.mrf.mxu0
      %786 = vdwg.mxu0
      %s787 = scalar_lea.vmem %s218, 24
      %788 = vst [vmem:[%s787] sm:$0xff] %v784
      %p789 = scmp.lt.s32.totalorder %s18, 1
      %s790 = scalar_select %p789, %s18, 1
      %p791 = scmp.lt.s32.totalorder %s19, 0
      %s792 = scalar_select %p791, %s19, 0
      %s793 = smul.addr %s790, 4
      %s794 = sadd.s32 %s792, %s793
      %s795 = smul.addr %s794, 8
      %s796 = scalar_lea.vmem %s3, %s795
      // Predicated region
      $region33: #{biaffine_forward.1} parent=31 // pred_check
        %p797 = pneg %p121
      $region34: #{biaffine_forward.1} parent=31 // pred_check_branch
        %799 = sbr.rel (%p797) target = $region36
      $region35: #{biaffine_forward.1} parent=31 // pred_region
        _
      $region36: #{biaffine_forward.1} parent=31 // pred_fallthru
        _
    $region32: #{biaffine_forward.1} parent=5 // pred_fallthru
      _
    %p800 = scmp.le.s32.totalorder 2, %s9
    // Predicated region
    $region37: #{biaffine_forward.1} parent=5 // pred_check
      %p801 = pneg %p800
    $region38: #{biaffine_forward.1} parent=5 // pred_check_branch
      %803 = sbr.rel (%p801) target = $region40
    $region39: #{biaffine_forward.1} parent=5 // pred_region
      %s804 = ssub.s32 %s9, 2
      // Predicated region
      $region41: #{biaffine_forward.1} parent=39 // pred_check
        %p805 = pneg %p127
      $region42: #{biaffine_forward.1} parent=39 // pred_check_branch
        %807 = sbr.rel (%p805) target = $region44
      $region43: #{biaffine_forward.1} parent=39 // pred_region
        %p808 = scmp.lt.s32.totalorder %s20, 1
        %s809 = scalar_select %p808, %s20, 1
        %p810 = scmp.lt.s32.totalorder %s21, 0
        %s811 = scalar_select %p810, %s21, 0
        %s812 = smul.addr %s809, 4
        %s813 = sadd.s32 %s811, %s812
        %s814 = smul.addr %s813, 8
        %s815 = scalar_lea.vmem %s3, %s814
      $region44: #{biaffine_forward.1} parent=39 // pred_fallthru
        _
    $region40: #{biaffine_forward.1} parent=5 // pred_fallthru
      _
  $region6: #{biaffine_forward.1} parent=0 // loop_footer
    %s13 = sadd.s32 1, %s9
  $region7: #{biaffine_forward.1} parent=0 // loop_footer_branch
    %8 = sbr.rel target = $region3
  $region8: #{biaffine_forward.1} parent=0 // loop_exit
    _

</llo_original>
